<compile_context>
chip_gen: v7x
topology: tpu7x:2x2x1
jax: 0.10.0
libtpu: 0.0.40
codegen_flags: <defaults>
</compile_context>

<pallas_src>
import functools

import jax
import jax.numpy as jnp
from jax import lax
from jax.experimental import pallas as pl
from jax.experimental.pallas import tpu as pltpu


def _round_up(x, m):
    return ((x + m - 1) // m) * m


def _matchingnet_kernel(q_ref, sn_ref, g_ref, out_ref, *, scale_factor):
    # q_ref : (TQ, Dp)  raw query tile
    # sn_ref: (S,  Dp)  pre-L2-normalized support (VMEM resident across grid)
    # g_ref : (S,  NWp) 0/1 group matrix (zero-padded columns past n_way)
    # out_ref: (TQ, NWp)
    eps = jnp.float32(1e-12)  # F.normalize default eps

    q = q_ref[...].astype(jnp.float32)
    # Fold scale_factor into the query normalization:
    #   qn = q * scale / max(||q||, eps) == q * scale * rsqrt(max(||q||^2, eps^2))
    sumsq = jnp.sum(q * q, axis=-1, keepdims=True)
    inv = lax.rsqrt(jnp.maximum(sumsq, eps * eps)) * jnp.float32(scale_factor)
    qn = (q * inv).astype(sn_ref.dtype)

    # logits = scale * cosine: contract (TQ, Dp) with (S, Dp) on Dp — no transpose.
    logits = lax.dot_general(
        qn, sn_ref[...],
        dimension_numbers=(((1,), (1,)), ((), ())),
        preferred_element_type=jnp.float32)

    # Numerically stable softmax with the normalization fused AFTER the grouped
    # sum: sum_{s in class w} prob[:, s] == (sum_{s in w} e[:, s]) / sum_s e[:, s].
    m = jnp.max(logits, axis=-1, keepdims=True)
    e = jnp.exp(logits - m)
    eg = jnp.dot(e, g_ref[...], preferred_element_type=jnp.float32)   # (TQ, NWp)
    # Padded group columns are all-zero, so sum(eg) == sum(e).
    denom = jnp.sum(eg, axis=-1, keepdims=True)
    out_ref[...] = (eg * pl.reciprocal(denom, approx=True)).astype(out_ref.dtype)


def matching_net_forward(z_support, z_query, scale_factor=100.0, *, tq_max=512):
    """MatchingNet forward. z_support: (n_way, n_support, D); z_query: (Q, D).
    Returns (Q, n_way) float32 class scores (each row sums to 1)."""
    n_way, n_support, feature_dim = z_support.shape
    n_queries = z_query.shape[0]
    s = n_way * n_support
    eps = jnp.float32(1e-12)

    # ---- wrapper-side one-time work / layout plumbing -----------------------
    # Normalize the support set once (hoisted out of the per-query-tile loop).
    s_flat = z_support.reshape(s, feature_dim)
    s_f32 = s_flat.astype(jnp.float32)
    s_inv = lax.rsqrt(
        jnp.maximum(jnp.sum(s_f32 * s_f32, axis=-1, keepdims=True), eps * eps))
    sn = (s_f32 * s_inv).astype(z_support.dtype)  # bf16 support stays bf16 for MXU

    # Pad feature dim to a multiple of 128 lanes (zero columns don't change
    # norms or dot products).
    d_pad = _round_up(feature_dim, 128)
    if d_pad != feature_dim:
        sn = jnp.pad(sn, ((0, 0), (0, d_pad - feature_dim)))
        z_query = jnp.pad(z_query, ((0, 0), (0, d_pad - feature_dim)))

    # Query tile: multiple of 8 sublanes, capped (default 512) so the per-tile
    # (TQ, S) temporaries stay well inside v7x's 64 MiB VMEM with double-buffered
    # query tiles.
    tq = min(tq_max, _round_up(n_queries, 8))
    q_pad = _round_up(n_queries, tq)
    if q_pad != n_queries:
        z_query = jnp.pad(z_query, ((0, q_pad - n_queries), (0, 0)))

    # Group matrix with lane-dense (>=128) output columns:
    #   g[s, w] = 1 iff support sample s belongs to class w; extra columns zero.
    nw_pad = _round_up(max(n_way, 128), 128)
    group = (
        (jnp.arange(s)[:, None] // n_support) == jnp.arange(nw_pad)[None, :]
    ).astype(jnp.float32)

    kernel = functools.partial(_matchingnet_kernel, scale_factor=scale_factor)

    out = pl.pallas_call(
        kernel,
        out_shape=jax.ShapeDtypeStruct((q_pad, nw_pad), jnp.float32),
        grid=(q_pad // tq,),
        in_specs=[
            pl.BlockSpec((tq, d_pad), lambda i: (i, 0)),   # query tile (pipelined)
            pl.BlockSpec((s, d_pad), lambda i: (0, 0)),    # support    (resident)
            pl.BlockSpec((s, nw_pad), lambda i: (0, 0)),   # group      (resident)
        ],
        out_specs=pl.BlockSpec((tq, nw_pad), lambda i: (i, 0)),
        compiler_params=pltpu.CompilerParams(
            dimension_semantics=("parallel",)),
    )(z_query, sn, group)

    return out[:n_queries, :n_way]


def _reference_forward(z_support, z_query, scale_factor=100.0):
    # Pure-JAX reference mirroring the PyTorch module, for a sanity check.
    n_way, n_support, feature_dim = z_support.shape
    eps = 1e-12

    def normalize(x):
        n = jnp.sqrt(jnp.sum(x * x, axis=-1, keepdims=True))
        return x / jnp.maximum(n, eps)

    q = normalize(z_query.reshape(-1, feature_dim))
    s = normalize(z_support.reshape(-1, feature_dim))
    cos = q @ s.T
    prob = jax.nn.softmax(cos * scale_factor, axis=-1)
    return prob.reshape(-1, n_way, n_support).sum(-1)


if __name__ == "__main__":
    n_way, n_support, n_query, feature_dim = 4, 4, 2, 64

    key = jax.random.PRNGKey(0)
    k1, k2 = jax.random.split(key)
    z_support = jax.random.normal(k1, (n_way, n_support, feature_dim), jnp.float32)
    z_query = jax.random.normal(k2, (n_way * n_query, feature_dim), jnp.float32)

    scores = matching_net_forward(z_support, z_query, scale_factor=100.0)
    scores = jax.block_until_ready(scores)

    ref = _reference_forward(z_support, z_query, scale_factor=100.0)
    assert scores.shape == (n_way * n_query, n_way)
    # approx=True EUP reciprocal in the softmax denominator trades exact-divide
    # parity for a free VLIW slot; tolerance relaxed accordingly.
    assert jnp.allclose(scores, ref, atol=2e-3, rtol=2e-3), float(
        jnp.max(jnp.abs(scores - ref)))

    print("KERNEL_OK")
</pallas_src>

<mosaic_0001>
module attributes {stable_mosaic.version = 11 : i64} {
  func.func @_matchingnet_kernel(%arg0: i32, %arg1: memref<8x128xf32, #tpu.memory_space<vmem>>, %arg2: memref<16x128xf32, #tpu.memory_space<vmem>>, %arg3: memref<16x128xf32, #tpu.memory_space<vmem>>, %arg4: memref<8x128xf32, #tpu.memory_space<vmem>>) attributes {dimension_semantics = [#tpu.dimension_semantics<parallel>], iteration_bounds = array<i64: 1>, scalar_prefetch = 0 : i64, scratch_operands = 0 : i64, tpu.core_type = #tpu.core_type<tc>, window_params = [{transform_indices = @transform_0, window_bounds = array<i64: 8, 128>}, {pipeline_mode = #tpu.pipeline_mode<synchronous>, transform_indices = @transform_1, window_bounds = array<i64: 16, 128>}, {pipeline_mode = #tpu.pipeline_mode<synchronous>, transform_indices = @transform_2, window_bounds = array<i64: 16, 128>}, {transform_indices = @transform_3, window_bounds = array<i64: 8, 128>}]} {
    %c0 = arith.constant 0 : index
    %c0_0 = arith.constant 0 : index
    %0 = vector.load %arg1[%c0, %c0_0] : memref<8x128xf32, #tpu.memory_space<vmem>>, vector<8x128xf32>
    %1 = arith.mulf %0, %0 : vector<8x128xf32>
    %cst = arith.constant dense<0.000000e+00> : vector<8xf32>
    %2 = vector.multi_reduction <add>, %1, %cst [1] : vector<8x128xf32> to vector<8xf32>
    %3 = vector.shape_cast %2 : vector<8xf32> to vector<8x1xf32>
    %cst_1 = arith.constant 9.99999996E-13 : f32
    %cst_2 = arith.constant 9.99999996E-13 : f32
    %4 = arith.mulf %cst_1, %cst_2 : f32
    %5 = vector.broadcast %4 : f32 to vector<8x1xf32>
    %6 = arith.maximumf %3, %5 : vector<8x1xf32>
    %7 = math.rsqrt %6 : vector<8x1xf32>
    %cst_3 = arith.constant 1.000000e+02 : f32
    %8 = vector.broadcast %cst_3 : f32 to vector<8x1xf32>
    %9 = arith.mulf %7, %8 : vector<8x1xf32>
    %10 = vector.broadcast %9 : vector<8x1xf32> to vector<8x128xf32>
    %11 = arith.mulf %0, %10 : vector<8x128xf32>
    %c0_4 = arith.constant 0 : index
    %c0_5 = arith.constant 0 : index
    %12 = vector.load %arg2[%c0_4, %c0_5] : memref<16x128xf32, #tpu.memory_space<vmem>>, vector<16x128xf32>
    %cst_6 = arith.constant dense<0.000000e+00> : vector<8x16xf32>
    %13 = tpu.matmul %11, %12, %cst_6 {dimension_numbers = #tpu.dot_dimension_numbers<[1], [1], [0], [0], [0, 0, 1, 0], [], []>} : vector<8x128xf32>, vector<16x128xf32>, vector<8x16xf32> -> vector<8x16xf32>
    %cst_7 = arith.constant dense<0xFF800000> : vector<8xf32>
    %14 = vector.multi_reduction <maximumf>, %13, %cst_7 [1] : vector<8x16xf32> to vector<8xf32>
    %15 = vector.shape_cast %14 : vector<8xf32> to vector<8x1xf32>
    %16 = vector.broadcast %15 : vector<8x1xf32> to vector<8x16xf32>
    %17 = arith.subf %13, %16 : vector<8x16xf32>
    %18 = math.exp %17 : vector<8x16xf32>
    %c0_8 = arith.constant 0 : index
    %c0_9 = arith.constant 0 : index
    %19 = vector.load %arg3[%c0_8, %c0_9] : memref<16x128xf32, #tpu.memory_space<vmem>>, vector<16x128xf32>
    %cst_10 = arith.constant dense<0.000000e+00> : vector<8x128xf32>
    %20 = tpu.matmul %18, %19, %cst_10 {dimension_numbers = #tpu.dot_dimension_numbers<[1], [0], [0], [1], [0, 0, 1, 1], [], []>} : vector<8x16xf32>, vector<16x128xf32>, vector<8x128xf32> -> vector<8x128xf32>
    %cst_11 = arith.constant dense<0.000000e+00> : vector<8xf32>
    %21 = vector.multi_reduction <add>, %20, %cst_11 [1] : vector<8x128xf32> to vector<8xf32>
    %22 = vector.shape_cast %21 : vector<8xf32> to vector<8x1xf32>
    %23 = tpu.reciprocal %22 {approx = true} : vector<8x1xf32> -> vector<8x1xf32>
    %24 = vector.broadcast %23 : vector<8x1xf32> to vector<8x128xf32>
    %25 = arith.mulf %20, %24 : vector<8x128xf32>
    %c0_12 = arith.constant 0 : index
    %c0_13 = arith.constant 0 : index
    %26 = vector.load %arg4[%c0_12, %c0_13] : memref<8x128xf32, #tpu.memory_space<vmem>>, vector<8x128xf32>
    tpu.vector_store %arg4[%c0_12, %c0_13], %25 {strides = array<i32>} : memref<8x128xf32, #tpu.memory_space<vmem>>, vector<8x128xf32>,
    return
  }
  func.func @transform_0(%arg0: i32) -> (i32, i32) {
    %c0_i32 = arith.constant 0 : i32
    %c0_i32_0 = arith.constant 0 : i32
    return %arg0, %c0_i32 : i32, i32
  }
  func.func @transform_1(%arg0: i32) -> (i32, i32) {
    %c0_i32 = arith.constant 0 : i32
    %c0_i32_0 = arith.constant 0 : i32
    %c0_i32_1 = arith.constant 0 : i32
    return %c0_i32, %c0_i32_0 : i32, i32
  }
  func.func @transform_2(%arg0: i32) -> (i32, i32) {
    %c0_i32 = arith.constant 0 : i32
    %c0_i32_0 = arith.constant 0 : i32
    %c0_i32_1 = arith.constant 0 : i32
    return %c0_i32, %c0_i32_0 : i32, i32
  }
  func.func @transform_3(%arg0: i32) -> (i32, i32) {
    %c0_i32 = arith.constant 0 : i32
    %c0_i32_0 = arith.constant 0 : i32
    return %arg0, %c0_i32 : i32, i32
  }
}

</mosaic_0001>

<llo_original>
// kernel: tpu_custom_call.1
$region0: #{tpu_custom_call.1}
  #allocation0 [shape = 'u32[]', space=smem, size = 0x4, offset = 0x4, fixed_abs, tag = 'smem constant byte address 0x4 - core index']
  #allocation1 [shape = 'u32[144,128]{1,0:T(1,128)}', space=vmem, size = 0x12000, scoped, tag = 'internal scratch']
  %s0 = inlined_call_operand.hbm [shape: f32[8,128], index: 0, kind: input, shape index: {}]
  %s1 = inlined_call_operand.hbm [shape: f32[16,128], index: 1, kind: input, shape index: {}]
  %s2 = inlined_call_operand.hbm [shape: f32[16,128], index: 2, kind: input, shape index: {}]
  %s3 = inlined_call_operand.hbm [shape: f32[8,128], index: 3, kind: output, shape index: {}]
  %s4 = sld [smem:[#allocation0]]
  $region34: #{tpu_custom_call.1} parent=0
    _
  %s6 = ssub.s32 1, %s4
  %s7 = scalar_select 0, %s6, %s4
  $region1: #{tpu_custom_call.1} parent=0
    #allocation2 [shape = 'u8[4096]{0}', space=vmem, size = 0x1000, scoped, tag = 'input window, operand 0, single buffered']
    #allocation3 [shape = 's32[1]{0}', space=sflag, size = 0x4, scoped, tag = 'scoped memory for tpu_custom_call.1']
    #allocation4 [shape = 's32[1]{0}', space=sflag, size = 0x4, scoped, tag = 'scoped memory for tpu_custom_call.1']
    #allocation5 [shape = 'u8[8192]{0}', space=vmem, size = 0x2000, scoped, tag = 'input window, operand 1, single buffered']
    #allocation6 [shape = 's32[1]{0}', space=sflag, size = 0x4, scoped, tag = 'scoped memory for tpu_custom_call.1']
    #allocation7 [shape = 'u8[8192]{0}', space=vmem, size = 0x2000, scoped, tag = 'input window, operand 2, single buffered']
    #allocation8 [shape = 'u8[4096]{0}', space=vmem, size = 0x1000, scoped, tag = 'output window, operand 0, single buffered']
    %8 = vsyncpa [#allocation3], 0
    %9 = vsyncpa [#allocation6], 0
    %10 = vsyncpa [#allocation4], 0
    // Predicated region
    $region2: #{tpu_custom_call.1} parent=1 // pred_check
      _
    $region3: #{tpu_custom_call.1} parent=1 // pred_check_branch
      %12 = sbr.rel (0) target = $region5
    $region4: #{tpu_custom_call.1} parent=1 // pred_region
      %s14 = ssub.s32 128, 128
      %15 = vsyncadd [#allocation3], %s14
      %s17 = sshll.u32 [#allocation2], 4
      %s18 = int_to_ptr.vmem [resolvable:$true] %s17
      %20 = dma.hbm_to_vmem [thread:$0]  %s0, 128, %s18, [#allocation3]
    $region5: #{tpu_custom_call.1} parent=1 // pred_fallthru
      _
    // Predicated region
    $region6: #{tpu_custom_call.1} parent=1 // pred_check
      _
    $region7: #{tpu_custom_call.1} parent=1 // pred_check_branch
      %22 = sbr.rel (0) target = $region9
    $region8: #{tpu_custom_call.1} parent=1 // pred_region
      %s24 = ssub.s32 256, 256
      %25 = vsyncadd [#allocation6], %s24
      %s26 = sshll.u32 [#allocation5], 4
      %s27 = int_to_ptr.vmem [resolvable:$true] %s26
      %32 = dma.hbm_to_vmem [thread:$0]  %s1, 256, %s27, [#allocation6], 128, 128, 8
    $region9: #{tpu_custom_call.1} parent=1 // pred_fallthru
      _
    // Predicated region
    $region10: #{tpu_custom_call.1} parent=1 // pred_check
      _
    $region11: #{tpu_custom_call.1} parent=1 // pred_check_branch
      %34 = sbr.rel (0) target = $region13
    $region12: #{tpu_custom_call.1} parent=1 // pred_region
      %s36 = ssub.s32 256, 256
      %37 = vsyncadd [#allocation6], %s36
      %s38 = sshll.u32 [#allocation7], 4
      %s39 = int_to_ptr.vmem [resolvable:$true] %s38
      %44 = dma.hbm_to_vmem [thread:$0]  %s2, 256, %s39, [#allocation6], 128, 128, 8
    $region13: #{tpu_custom_call.1} parent=1 // pred_fallthru
      _
    // Predicated region
    $region14: #{tpu_custom_call.1} parent=1 // pred_check
      _
    $region15: #{tpu_custom_call.1} parent=1 // pred_check_branch
      %46 = sbr.rel (0) target = $region17
    $region16: #{tpu_custom_call.1} parent=1 // pred_region
      %47 = dma.done [#allocation3], 128
    $region17: #{tpu_custom_call.1} parent=1 // pred_fallthru
      _
    // Predicated region
    $region18: #{tpu_custom_call.1} parent=1 // pred_check
      _
    $region19: #{tpu_custom_call.1} parent=1 // pred_check_branch
      %49 = sbr.rel (0) target = $region21
    $region20: #{tpu_custom_call.1} parent=1 // pred_region
      %50 = dma.done [#allocation6], 256
    $region21: #{tpu_custom_call.1} parent=1 // pred_fallthru
      _
    // Predicated region
    $region22: #{tpu_custom_call.1} parent=1 // pred_check
      _
    $region23: #{tpu_custom_call.1} parent=1 // pred_check_branch
      %52 = sbr.rel (0) target = $region25
    $region24: #{tpu_custom_call.1} parent=1 // pred_region
      %53 = dma.done [#allocation6], 256
    $region25: #{tpu_custom_call.1} parent=1 // pred_fallthru
      _
    %v54 = vld [vmem:[#allocation2] sm:$0xff]
    %v55 = vmul.f32 %v54, %v54
    %56 = vadd.xlane.f32.xlu0 %v55
    %v57 = vpop.xlane.xlu0 %56
    %v58 = vmax.f32 %v57, 1e-24
    %v59 = vrsqrt.pop %v58
    %v60 = vmul.f32 %v59, 100.0
    %v61 = vmul.f32 %v54, %v60
    %v62 = vld [vmem:[#allocation5] sm:$0xff]
    %v63 = vld [vmem:[#allocation5 + $0x8] sm:$0xff]
    %64 = vmatprep.subr.mxu0 0.0
    %65 = vmatpush1.xpose.msra.mxu0 %v62
    %66 = vmatprep.subr.mxu0 0.0
    %67 = vmatpush1.xpose.msra.mxu0 %v63
    %68 = vmatprep.subr.mxu0 0.0
    %69 = vmatpush1.xpose.msra.mxu0 0.0
    %70 = vmatprep.subr.mxu0 0.0
    %71 = vmatpush1.xpose.msra.mxu0 0.0
    %72 = vmatprep.subr.mxu0 0.0
    %73 = vmatpush1.xpose.msra.mxu0 0.0
    %74 = vmatprep.subr.mxu0 0.0
    %75 = vmatpush1.xpose.msra.mxu0 0.0
    %76 = vmatprep.subr.mxu0 0.0
    %77 = vmatpush1.xpose.msra.mxu0 0.0
    %78 = vmatprep.subr.mxu0 0.0
    %79 = vmatpush1.xpose.msra.mxu0 0.0
    %80 = vmatprep.subr.mxu0 0.0
    %81 = vmatpush1.xpose.msra.mxu0 0.0
    %82 = vmatprep.subr.mxu0 0.0
    %83 = vmatpush1.xpose.msra.mxu0 0.0
    %84 = vmatprep.subr.mxu0 0.0
    %85 = vmatpush1.xpose.msra.mxu0 0.0
    %86 = vmatprep.subr.mxu0 0.0
    %87 = vmatpush1.xpose.msra.mxu0 0.0
    %88 = vmatprep.subr.mxu0 0.0
    %89 = vmatpush1.xpose.msra.mxu0 0.0
    %90 = vmatprep.subr.mxu0 0.0
    %91 = vmatpush1.xpose.msra.mxu0 0.0
    %92 = vmatprep.subr.mxu0 0.0
    %93 = vmatpush1.xpose.msra.mxu0 0.0
    %94 = vmatprep.subr.mxu0 0.0
    %95 = vmatpush1.xpose.msra.mxu0 0.0
    %96 = vmatprep.subr.mxu0 0.0
    %97 = vmatpush1.xpose.msra.mxu0 0.0
    %98 = vmatprep.subr.mxu0 0.0
    %99 = vmatpush1.xpose.msra.mxu0 0.0
    %100 = vmatprep.subr.mxu0 0.0
    %101 = vmatpush1.xpose.msra.mxu0 0.0
    %102 = vmatprep.subr.mxu0 0.0
    %103 = vmatpush1.xpose.msra.mxu0 0.0
    %104 = vmatprep.subr.mxu0 0.0
    %105 = vmatpush1.xpose.msra.mxu0 0.0
    %106 = vmatprep.subr.mxu0 0.0
    %107 = vmatpush1.xpose.msra.mxu0 0.0
    %108 = vmatprep.subr.mxu0 0.0
    %109 = vmatpush1.xpose.msra.mxu0 0.0
    %110 = vmatprep.subr.mxu0 0.0
    %111 = vmatpush1.xpose.msra.mxu0 0.0
    %112 = vmatprep.subr.mxu0 0.0
    %113 = vmatpush1.xpose.msra.mxu0 0.0
    %114 = vmatprep.subr.mxu0 0.0
    %115 = vmatpush1.xpose.msra.mxu0 0.0
    %116 = vmatprep.subr.mxu0 0.0
    %117 = vmatpush1.xpose.msra.mxu0 0.0
    %118 = vmatprep.subr.mxu0 0.0
    %119 = vmatpush1.xpose.msra.mxu0 0.0
    %120 = vmatprep.subr.mxu0 0.0
    %121 = vmatpush1.xpose.msra.mxu0 0.0
    %122 = vmatprep.subr.mxu0 0.0
    %123 = vmatpush1.xpose.msra.mxu0 0.0
    %124 = vmatprep.subr.mxu0 0.0
    %125 = vmatpush1.xpose.msra.mxu0 0.0
    %126 = vmatprep.subr.mxu0 0.0
    %127 = vmatpush1.xpose.msra.mxu0 0.0
    %128 = vmatprep.mubr.f32.mxu0 0.0
    %129 = vmatmul.mubr.f32.gmra.mrb[0].mxu0 %v61
    %v130 = vpop.f32.mrb[0].mxu0
    %v131 = vadd.f32 0.0, %v130
    %v132 = vpop.f32.mrb[0].mxu0
    %133 = vdwg.mxu0
    %vm134 = vcmask 130048
    %v135 = vsel %vm134, %v131, -inf
    %136 = vmax.xlane.f32.xlu0 %v135
    %v137 = vpop.xlane.xlu0 %136
    %v138 = vsub.f32 %v131, %v137
    %v139 = vmul.f32 %v138, 1.442695
    %v140 = vpow.pop %v139
    %v141 = vld [vmem:[#allocation7] sm:$0xff]
    %v142 = vld [vmem:[#allocation7 + $0x8] sm:$0xff]
    %v144 = vsel %vm134, %v140, 0
    %146 = vmatprep.subr.mxu0 0.0
    %147 = vmatpush1.msra.mxu0 %v141
    %148 = vmatprep.subr.mxu0 0.0
    %149 = vmatpush1.msra.mxu0 %v142
    %150 = vmatprep.subr.mxu0 0.0
    %151 = vmatpush1.msra.mxu0 0.0
    %152 = vmatprep.subr.mxu0 0.0
    %153 = vmatpush1.msra.mxu0 0.0
    %154 = vmatprep.subr.mxu0 0.0
    %155 = vmatpush1.msra.mxu0 0.0
    %156 = vmatprep.subr.mxu0 0.0
    %157 = vmatpush1.msra.mxu0 0.0
    %158 = vmatprep.subr.mxu0 0.0
    %159 = vmatpush1.msra.mxu0 0.0
    %160 = vmatprep.subr.mxu0 0.0
    %161 = vmatpush1.msra.mxu0 0.0
    %162 = vmatprep.subr.mxu0 0.0
    %163 = vmatpush1.msra.mxu0 0.0
    %164 = vmatprep.subr.mxu0 0.0
    %165 = vmatpush1.msra.mxu0 0.0
    %166 = vmatprep.subr.mxu0 0.0
    %167 = vmatpush1.msra.mxu0 0.0
    %168 = vmatprep.subr.mxu0 0.0
    %169 = vmatpush1.msra.mxu0 0.0
    %170 = vmatprep.subr.mxu0 0.0
    %171 = vmatpush1.msra.mxu0 0.0
    %172 = vmatprep.subr.mxu0 0.0
    %173 = vmatpush1.msra.mxu0 0.0
    %174 = vmatprep.subr.mxu0 0.0
    %175 = vmatpush1.msra.mxu0 0.0
    %176 = vmatprep.subr.mxu0 0.0
    %177 = vmatpush1.msra.mxu0 0.0
    %178 = vmatprep.subr.mxu0 0.0
    %179 = vmatpush1.msra.mxu0 0.0
    %180 = vmatprep.subr.mxu0 0.0
    %181 = vmatpush1.msra.mxu0 0.0
    %182 = vmatprep.subr.mxu0 0.0
    %183 = vmatpush1.msra.mxu0 0.0
    %184 = vmatprep.subr.mxu0 0.0
    %185 = vmatpush1.msra.mxu0 0.0
    %186 = vmatprep.subr.mxu0 0.0
    %187 = vmatpush1.msra.mxu0 0.0
    %188 = vmatprep.subr.mxu0 0.0
    %189 = vmatpush1.msra.mxu0 0.0
    %190 = vmatprep.subr.mxu0 0.0
    %191 = vmatpush1.msra.mxu0 0.0
    %192 = vmatprep.subr.mxu0 0.0
    %193 = vmatpush1.msra.mxu0 0.0
    %194 = vmatprep.subr.mxu0 0.0
    %195 = vmatpush1.msra.mxu0 0.0
    %196 = vmatprep.subr.mxu0 0.0
    %197 = vmatpush1.msra.mxu0 0.0
    %198 = vmatprep.subr.mxu0 0.0
    %199 = vmatpush1.msra.mxu0 0.0
    %200 = vmatprep.subr.mxu0 0.0
    %201 = vmatpush1.msra.mxu0 0.0
    %202 = vmatprep.subr.mxu0 0.0
    %203 = vmatpush1.msra.mxu0 0.0
    %204 = vmatprep.subr.mxu0 0.0
    %205 = vmatpush1.msra.mxu0 0.0
    %206 = vmatprep.subr.mxu0 0.0
    %207 = vmatpush1.msra.mxu0 0.0
    %208 = vmatprep.subr.mxu0 0.0
    %209 = vmatpush1.msra.mxu0 0.0
    %210 = vmatprep.mubr.f32.mxu0 0.0
    %211 = vmatmul.mubr.f32.gmra.mrb[0].mxu0 %v144
    %v212 = vpop.f32.mrb[0].mxu0
    %v213 = vadd.f32 0.0, %v212
    %v214 = vpop.f32.mrb[0].mxu0
    %215 = vdwg.mxu0
    %216 = vadd.xlane.f32.xlu0 %v213
    %v217 = vpop.xlane.xlu0 %216
    %v218 = vrcp.pop %v217
    %v219 = vmul.f32 %v213, %v218
    %220 = vst [vmem:[#allocation8] sm:$0xff] %v219
    // Predicated region
    $region26: #{tpu_custom_call.1} parent=1 // pred_check
      _
    $region27: #{tpu_custom_call.1} parent=1 // pred_check_branch
      %222 = sbr.rel (0) target = $region29
    $region28: #{tpu_custom_call.1} parent=1 // pred_region
      %s224 = ssub.s32 128, 128
      %225 = vsyncadd [#allocation4], %s224
      %s227 = sshll.u32 [#allocation8], 4
      %s228 = int_to_ptr.vmem [resolvable:$true] %s227
      %230 = dma.vmem_to_hbm [thread:$0]  %s228, 128, %s3, [#allocation4]
    $region29: #{tpu_custom_call.1} parent=1 // pred_fallthru
      _
    // Predicated region
    $region30: #{tpu_custom_call.1} parent=1 // pred_check
      _
    $region31: #{tpu_custom_call.1} parent=1 // pred_check_branch
      %232 = sbr.rel (0) target = $region33
    $region32: #{tpu_custom_call.1} parent=1 // pred_region
      %233 = dma.done [#allocation4], 128
    $region33: #{tpu_custom_call.1} parent=1 // pred_fallthru
      _
    %234 = vsyncpa [#allocation3], 1
    %235 = vsyncpa [#allocation6], 1
    %236 = vsyncpa [#allocation4], 1

</llo_original>
